<compile_context>
chip_gen: v5e
topology: v5e:2x2
jax: 0.10.0
libtpu: 0.0.40
codegen_flags: <defaults>
</compile_context>

<pallas_src>
import functools

import jax
import jax.numpy as jnp
from jax import lax
from jax.experimental import pallas as pl
from jax.experimental.pallas import tpu as pltpu


# Contract the last dim of both operands (flash-attention q @ k^T pattern):
# h0T[h, n] = sum_k w0[h, k] * x[n, k]  -- no wrapper-side x.T needed.
_TRANS_B_DIMS = (((1,), (1,)), ((), ()))


def _mlp_kernel(x_ref, w0_ref, w1_ref, w2_ref, outT_ref):
    # x_ref   : [tn, dim_in]  f32   (row-major input tile)
    # w0_ref  : [H, dim_in]   f32
    # w1_ref  : [H, H]        bf16
    # w2_ref  : [dim_out, H]  bf16
    # outT_ref: [dim_out, tn] f32   (feature-major -> lane-dense stores)
    x = x_ref[...]

    # Layer 0: h0T = w0 @ x.T -> [H, tn].  f32 operands, DEFAULT precision
    # (single MXU pass); the implicit relayout of the [tn, 8] tile rides the XLU.
    h = lax.dot_general(w0_ref[...], x, _TRANS_B_DIMS,
                        preferred_element_type=jnp.float32)
    h = jnp.maximum(h, 0.0).astype(jnp.bfloat16)   # ReLU in f32, then bf16

    # Layer 1: [H, H] @ [H, tn], bf16 operands, f32 accumulation.
    h = jnp.dot(w1_ref[...], h, preferred_element_type=jnp.float32)
    h = jnp.maximum(h, 0.0).astype(jnp.bfloat16)

    # Layer 2: [dim_out, H] @ [H, tn].  (Candidate for VPU+XLU since dim_out=4
    # leaves most MXU rows as padding; left on the MXU pending measurement.)
    out = jnp.dot(w2_ref[...], h, preferred_element_type=jnp.float32)

    outT_ref[...] = out.astype(outT_ref.dtype)     # output_activation = 'none'


def _round_up(a, b):
    return ((a + b - 1) // b) * b


def _pick_tile(n, tn_max):
    """Column-tile size along N.

    Small n: one full-extent block (always a legal block shape).
    Large n: a multiple of 128, aiming for >= 8 grid steps (v7x 2-TC balance),
    capped at tn_max for per-step VMEM.
    """
    if n <= 512:
        return n
    return max(128, min(tn_max, _round_up(pl.cdiv(n, 8), 128)))


@functools.partial(jax.jit, static_argnames=("tn_max",))
def vanilla_mlp(x, w0, w1, w2, *, tn_max=4096):
    """Fused VanillaMLP forward: relu(relu(x @ w0.T) @ w1.T) @ w2.T.

    x : [N, dim_in] float32 (row-major, same layout as the torch module)
    w0: [H, dim_in], w1: [H, H], w2: [dim_out, H]  (torch nn.Linear [out, in])
    returns [N, dim_out] float32
    """
    N, dim_in = x.shape
    H, dim_in_w = w0.shape
    dim_out, H_w = w2.shape
    assert dim_in_w == dim_in and w1.shape == (H, H) and H_w == H

    tn = _pick_tile(N, tn_max)
    grid_n = pl.cdiv(N, tn)

    outT = pl.pallas_call(
        _mlp_kernel,
        out_shape=jax.ShapeDtypeStruct((dim_out, N), jnp.float32),
        grid_spec=pltpu.PrefetchScalarGridSpec(
            num_scalar_prefetch=0,
            grid=(grid_n,),
            in_specs=[
                # Row-major x tile; last block may be partial (rows independent,
                # OOB output columns masked on store -> no jnp.pad needed).
                pl.BlockSpec((tn, dim_in), lambda i: (i, 0)),
                # Weights: whole-array blocks, constant index_maps -> DMA'd once
                # and VMEM-resident across all grid steps.
                pl.BlockSpec((H, dim_in), lambda i: (0, 0)),
                pl.BlockSpec((H, H), lambda i: (0, 0)),
                pl.BlockSpec((dim_out, H), lambda i: (0, 0)),
            ],
            # Feature-major output block: lane dim tn (multiple of 128 or the
            # full extent) -> unmasked, lane-dense stores.
            out_specs=pl.BlockSpec((dim_out, tn), lambda i: (0, i)),
        ),
        compiler_params=pltpu.CompilerParams(
            dimension_semantics=("parallel",),     # shards across v7x's 2 TCs
            vmem_limit_bytes=32 * 1024 * 1024,     # ~4 MiB actually needed
        ),
    )(x.astype(jnp.float32),
      w0.astype(jnp.float32),
      w1.astype(jnp.bfloat16),
      w2.astype(jnp.bfloat16))

    # Single small relayout left in the wrapper (N * dim_out * 4 bytes).
    return outT.T


def init_params(key, dim_in, dim_out, n_neurons):
    """Mirror nn.Linear's default init bound (1/sqrt(fan_in)), torch [out, in] layout."""
    k0, k1, k2 = jax.random.split(key, 3)

    def make(k, fan_out, fan_in):
        bound = 1.0 / (fan_in ** 0.5)
        return jax.random.uniform(k, (fan_out, fan_in), jnp.float32, -bound, bound)

    w0 = make(k0, n_neurons, dim_in)       # [H, dim_in]
    w1 = make(k1, n_neurons, n_neurons)    # [H, H]
    w2 = make(k2, dim_out, n_neurons)      # [dim_out, H]
    return w0, w1, w2


if __name__ == "__main__":
    # MLPConfig defaults: n_neurons=64, n_hidden_layers=2; dim_in=8, dim_out=4.
    # N=4000 exercises a multi-step grid (8 tiles of 512) plus a ragged tail.
    N, dim_in, dim_out, n_neurons = 4000, 8, 4, 64

    key = jax.random.PRNGKey(0)
    kx, kp = jax.random.split(key)
    x = jax.random.normal(kx, (N, dim_in), jnp.float32)
    w0, w1, w2 = init_params(kp, dim_in, dim_out, n_neurons)

    out = vanilla_mlp(x, w0, w1, w2)
    out = jax.block_until_ready(out)

    # Full-f32 reference (the torch module's math).  The kernel intentionally
    # runs the MXU in single-pass bf16 with f32 accumulation, so the tolerance
    # is relaxed accordingly.
    hi = jax.lax.Precision.HIGHEST
    ref = jnp.maximum(jnp.dot(x, w0.T, precision=hi), 0.0)
    ref = jnp.maximum(jnp.dot(ref, w1.T, precision=hi), 0.0)
    ref = jnp.dot(ref, w2.T, precision=hi)

    assert out.shape == (N, dim_out)
    assert bool(jnp.isfinite(out).all())
    assert jnp.allclose(out, ref, atol=5e-2, rtol=5e-2), (
        f"mismatch vs reference: max abs err = "
        f"{float(jnp.max(jnp.abs(out - ref)))}")

    print("KERNEL_OK")
</pallas_src>

<mosaic_0001>
module attributes {stable_mosaic.version = 11 : i64} {
  func.func @_mlp_kernel(%arg0: i32, %arg1: memref<512x8xf32, #tpu.memory_space<vmem>>, %arg2: memref<64x8xf32, #tpu.memory_space<vmem>>, %arg3: memref<64x64xbf16, #tpu.memory_space<vmem>>, %arg4: memref<4x64xbf16, #tpu.memory_space<vmem>>, %arg5: memref<4x512xf32, #tpu.memory_space<vmem>>) attributes {dimension_semantics = [#tpu.dimension_semantics<parallel>], iteration_bounds = array<i64: 8>, scalar_prefetch = 0 : i64, scratch_operands = 0 : i64, tpu.core_type = #tpu.core_type<tc>, window_params = [{transform_indices = @transform_0, window_bounds = array<i64: 512, 8>}, {pipeline_mode = #tpu.pipeline_mode<synchronous>, transform_indices = @transform_1, window_bounds = array<i64: 64, 8>}, {pipeline_mode = #tpu.pipeline_mode<synchronous>, transform_indices = @transform_2, window_bounds = array<i64: 64, 64>}, {pipeline_mode = #tpu.pipeline_mode<synchronous>, transform_indices = @transform_3, window_bounds = array<i64: 4, 64>}, {transform_indices = @transform_4, window_bounds = array<i64: 4, 512>}]} {
    %c0 = arith.constant 0 : index
    %c0_0 = arith.constant 0 : index
    %0 = vector.load %arg1[%c0, %c0_0] : memref<512x8xf32, #tpu.memory_space<vmem>>, vector<512x8xf32>
    %c0_1 = arith.constant 0 : index
    %c0_2 = arith.constant 0 : index
    %1 = vector.load %arg2[%c0_1, %c0_2] : memref<64x8xf32, #tpu.memory_space<vmem>>, vector<64x8xf32>
    %cst = arith.constant dense<0.000000e+00> : vector<64x512xf32>
    %2 = tpu.matmul %1, %0, %cst {dimension_numbers = #tpu.dot_dimension_numbers<[1], [1], [0], [0], [0, 0, 1, 0], [], []>} : vector<64x8xf32>, vector<512x8xf32>, vector<64x512xf32> -> vector<64x512xf32>
    %cst_3 = arith.constant 0.000000e+00 : f32
    %3 = vector.broadcast %cst_3 : f32 to vector<64x512xf32>
    %4 = arith.maximumf %2, %3 : vector<64x512xf32>
    %5 = arith.truncf %4 : vector<64x512xf32> to vector<64x512xbf16>
    %c0_4 = arith.constant 0 : index
    %c0_5 = arith.constant 0 : index
    %6 = vector.load %arg3[%c0_4, %c0_5] : memref<64x64xbf16, #tpu.memory_space<vmem>>, vector<64x64xbf16>
    %cst_6 = arith.constant dense<0.000000e+00> : vector<64x512xf32>
    %7 = tpu.matmul %6, %5, %cst_6 {dimension_numbers = #tpu.dot_dimension_numbers<[1], [0], [0], [1], [0, 0, 1, 1], [], []>} : vector<64x64xbf16>, vector<64x512xbf16>, vector<64x512xf32> -> vector<64x512xf32>
    %cst_7 = arith.constant 0.000000e+00 : f32
    %8 = vector.broadcast %cst_7 : f32 to vector<64x512xf32>
    %9 = arith.maximumf %7, %8 : vector<64x512xf32>
    %10 = arith.truncf %9 : vector<64x512xf32> to vector<64x512xbf16>
    %c0_8 = arith.constant 0 : index
    %c0_9 = arith.constant 0 : index
    %11 = vector.load %arg4[%c0_8, %c0_9] : memref<4x64xbf16, #tpu.memory_space<vmem>>, vector<4x64xbf16>
    %cst_10 = arith.constant dense<0.000000e+00> : vector<4x512xf32>
    %12 = tpu.matmul %11, %10, %cst_10 {dimension_numbers = #tpu.dot_dimension_numbers<[1], [0], [0], [1], [0, 0, 1, 1], [], []>} : vector<4x64xbf16>, vector<64x512xbf16>, vector<4x512xf32> -> vector<4x512xf32>
    %c0_11 = arith.constant 0 : index
    %c0_12 = arith.constant 0 : index
    %13 = vector.load %arg5[%c0_11, %c0_12] : memref<4x512xf32, #tpu.memory_space<vmem>>, vector<4x512xf32>
    tpu.vector_store %arg5[%c0_11, %c0_12], %12 {strides = array<i32>} : memref<4x512xf32, #tpu.memory_space<vmem>>, vector<4x512xf32>,
    return
  }
  func.func @transform_0(%arg0: i32) -> (i32, i32) {
    %c0_i32 = arith.constant 0 : i32
    %c0_i32_0 = arith.constant 0 : i32
    return %arg0, %c0_i32 : i32, i32
  }
  func.func @transform_1(%arg0: i32) -> (i32, i32) {
    %c0_i32 = arith.constant 0 : i32
    %c0_i32_0 = arith.constant 0 : i32
    %c0_i32_1 = arith.constant 0 : i32
    return %c0_i32, %c0_i32_0 : i32, i32
  }
  func.func @transform_2(%arg0: i32) -> (i32, i32) {
    %c0_i32 = arith.constant 0 : i32
    %c0_i32_0 = arith.constant 0 : i32
    %c0_i32_1 = arith.constant 0 : i32
    return %c0_i32, %c0_i32_0 : i32, i32
  }
  func.func @transform_3(%arg0: i32) -> (i32, i32) {
    %c0_i32 = arith.constant 0 : i32
    %c0_i32_0 = arith.constant 0 : i32
    %c0_i32_1 = arith.constant 0 : i32
    return %c0_i32, %c0_i32_0 : i32, i32
  }
  func.func @transform_4(%arg0: i32) -> (i32, i32) {
    %c0_i32 = arith.constant 0 : i32
    %c0_i32_0 = arith.constant 0 : i32
    return %c0_i32, %arg0 : i32, i32
  }
}

</mosaic_0001>

<llo_original>
// kernel: vanilla_mlp.1
$region0: #{vanilla_mlp.1}
  #allocation0 [shape = 'u32[]', space=smem, size = 0x4, offset = 0x4, fixed_abs, tag = 'smem constant byte address 0x4 - core index']
  #allocation1 [shape = 'u32[72,128]{1,0:T(1,128)}', space=vmem, size = 0x9000, scoped, tag = 'internal scratch']
  %s0 = inlined_call_operand.vmem [shape: f32[4000,8], index: 0, kind: input, shape index: {}]
  %s1 = inlined_call_operand.vmem [shape: f32[64,8], index: 1, kind: input, shape index: {}]
  %s2 = inlined_call_operand.vmem [shape: bf16[64,64], index: 2, kind: input, shape index: {}]
  %s3 = inlined_call_operand.vmem [shape: bf16[4,64], index: 3, kind: input, shape index: {}]
  %s4 = inlined_call_operand.hbm [shape: f32[4,4000], index: 4, kind: output, shape index: {}]
  %s5 = sld [smem:[#allocation0]]
  $region49: #{vanilla_mlp.1} parent=0
    _
  %s7 = ssub.s32 1, %s5
  %s8 = scalar_select 0, %s7, %s5
  $region1: #{vanilla_mlp.1} parent=0
    #allocation2 [shape = 'u8[16384]{0}', space=vmem, size = 0x4000, scoped, tag = 'output window, operand 0']
    #allocation3 [shape = 's32[2]{0}', space=sflag, size = 0x8, scoped, tag = 'scoped memory for vanilla_mlp.1']
    %9 = vsyncpa [#allocation3], 0
    %s10 = scalar_lea.sflag [#allocation3], 1
    %11 = vsyncpa %s10, 0
    loop: start=0, step=1, limit=10
    $region2: #{vanilla_mlp.1} parent=1 // loop_pre_header
      _
    $region3: #{vanilla_mlp.1} parent=1 // loop_header
      %s13 = sphi 0, %s17
      %p14 = scmp.ge.s32.totalorder %s13, 10
      %s23 = sphi 0, %s25
      %s26 = sphi 0, %s23
      %s27 = sphi 0, %s26
      %s43 = sphi 0, %s27
      %s47 = sphi 0, %s47
      %s49 = sphi 0, %s47
      %s50 = sphi 0, %s49
      %s64 = sphi 0, %s50
      %s68 = sphi 0, %s68
      %s70 = sphi 0, %s68
      %s71 = sphi 0, %s70
      %s85 = sphi 0, %s71
      %s89 = sphi 0, %s89
      %s91 = sphi 0, %s89
      %s92 = sphi 0, %s91
      %s106 = sphi 0, %s92
      %s112 = sphi 0, %s114
      %s115 = sphi 0, %s112
      %s116 = sphi 0, %s115
      %s132 = sphi 0, %s116
    $region4: #{vanilla_mlp.1} parent=1 // loop_header_branch
      %16 = sbr.rel (%p14) target = $region8
    $region5: #{vanilla_mlp.1} parent=1 // loop_body
      %s18 = ssub.s32 %s13, 1
      %s19 = ssub.s32 %s13, 2
      %s20 = sadd.s32 %s13, 1
      %s21 = ssub.s32 %s13, %s20
      %p22 = scmp.eq.s32.totalorder %s21, 0
      %s24 = sadd.s32 %s23, 1
      %s25 = scalar_select %p22, %s23, %s24
      %p28 = pneg %p22
      %p29 = scmp.eq.s32.totalorder %s13, 7
      %p30 = por %p28, %p29
      %p31 = scmp.ne.s32.totalorder %s23, %s26
      %p32 = scmp.eq.s32.totalorder %s13, 0
      %p33 = por %p31, %p32
      %p34 = scmp.ne.s32.totalorder %s23, %s26
      %p35 = scmp.eq.s32.totalorder %s18, 7
      %p36 = por %p34, %p35
      %p37 = scmp.ne.s32.totalorder %s26, %s27
      %p38 = scmp.eq.s32.totalorder %s18, 0
      %p39 = por %p37, %p38
      %p40 = scmp.ne.s32.totalorder %s26, %s27
      %p41 = scmp.eq.s32.totalorder %s19, 7
      %p42 = por %p40, %p41
      %p44 = scmp.ne.s32.totalorder %s27, %s43
      %p45 = scmp.eq.s32.totalorder %s19, 0
      %p46 = por %p44, %p45
      %s48 = sadd.s32 %s47, 1
      %p51 = scmp.eq.s32.totalorder %s13, 7
      %p52 = scmp.ne.s32.totalorder %s47, %s49
      %p53 = scmp.eq.s32.totalorder %s13, 0
      %p54 = por %p52, %p53
      %p55 = scmp.ne.s32.totalorder %s47, %s49
      %p56 = scmp.eq.s32.totalorder %s18, 7
      %p57 = por %p55, %p56
      %p58 = scmp.ne.s32.totalorder %s49, %s50
      %p59 = scmp.eq.s32.totalorder %s18, 0
      %p60 = por %p58, %p59
      %p61 = scmp.ne.s32.totalorder %s49, %s50
      %p62 = scmp.eq.s32.totalorder %s19, 7
      %p63 = por %p61, %p62
      %p65 = scmp.ne.s32.totalorder %s50, %s64
      %p66 = scmp.eq.s32.totalorder %s19, 0
      %p67 = por %p65, %p66
      %s69 = sadd.s32 %s68, 1
      %p72 = scmp.eq.s32.totalorder %s13, 7
      %p73 = scmp.ne.s32.totalorder %s68, %s70
      %p74 = scmp.eq.s32.totalorder %s13, 0
      %p75 = por %p73, %p74
      %p76 = scmp.ne.s32.totalorder %s68, %s70
      %p77 = scmp.eq.s32.totalorder %s18, 7
      %p78 = por %p76, %p77
      %p79 = scmp.ne.s32.totalorder %s70, %s71
      %p80 = scmp.eq.s32.totalorder %s18, 0
      %p81 = por %p79, %p80
      %p82 = scmp.ne.s32.totalorder %s70, %s71
      %p83 = scmp.eq.s32.totalorder %s19, 7
      %p84 = por %p82, %p83
      %p86 = scmp.ne.s32.totalorder %s71, %s85
      %p87 = scmp.eq.s32.totalorder %s19, 0
      %p88 = por %p86, %p87
      %s90 = sadd.s32 %s89, 1
      %p93 = scmp.eq.s32.totalorder %s13, 7
      %p94 = scmp.ne.s32.totalorder %s89, %s91
      %p95 = scmp.eq.s32.totalorder %s13, 0
      %p96 = por %p94, %p95
      %p97 = scmp.ne.s32.totalorder %s89, %s91
      %p98 = scmp.eq.s32.totalorder %s18, 7
      %p99 = por %p97, %p98
      %p100 = scmp.ne.s32.totalorder %s91, %s92
      %p101 = scmp.eq.s32.totalorder %s18, 0
      %p102 = por %p100, %p101
      %p103 = scmp.ne.s32.totalorder %s91, %s92
      %p104 = scmp.eq.s32.totalorder %s19, 7
      %p105 = por %p103, %p104
      %p107 = scmp.ne.s32.totalorder %s92, %s106
      %p108 = scmp.eq.s32.totalorder %s19, 0
      %p109 = por %p107, %p108
      %s110 = ssub.s32 %s13, %s20
      %p111 = scmp.eq.s32.totalorder %s110, 0
      %s113 = sadd.s32 %s112, 1
      %s114 = scalar_select %p111, %s112, %s113
      %p117 = pneg %p111
      %p118 = scmp.eq.s32.totalorder %s13, 7
      %p119 = por %p117, %p118
      %p120 = scmp.ne.s32.totalorder %s112, %s115
      %p121 = scmp.eq.s32.totalorder %s13, 0
      %p122 = por %p120, %p121
      %p123 = scmp.ne.s32.totalorder %s112, %s115
      %p124 = scmp.eq.s32.totalorder %s18, 7
      %p125 = por %p123, %p124
      %p126 = scmp.ne.s32.totalorder %s115, %s116
      %p127 = scmp.eq.s32.totalorder %s18, 0
      %p128 = por %p126, %p127
      %p129 = scmp.ne.s32.totalorder %s115, %s116
      %p130 = scmp.eq.s32.totalorder %s19, 7
      %p131 = por %p129, %p130
      %p133 = scmp.ne.s32.totalorder %s116, %s132
      %p134 = scmp.eq.s32.totalorder %s19, 0
      %p135 = por %p133, %p134
      %p136 = scmp.le.s32.totalorder 1, %s13
      %p137 = scmp.lt.s32.totalorder %s13, 9
      %p138 = pnand %p136, %p137
      %p139 = pneg %p138
      // Predicated region
      $region9: #{vanilla_mlp.1} parent=5 // pred_check
        _
      $region10: #{vanilla_mlp.1} parent=5 // pred_check_branch
        %141 = sbr.rel (%p138) target = $region12
      $region11: #{vanilla_mlp.1} parent=5 // pred_region
        %s142 = ssub.s32 %s13, 1
        // Predicated region
        $region13: #{vanilla_mlp.1} parent=11 // pred_check
          %p143 = pneg %p60
        $region14: #{vanilla_mlp.1} parent=11 // pred_check_branch
          %145 = sbr.rel (%p143) target = $region16
        $region15: #{vanilla_mlp.1} parent=11 // pred_region
          _
        $region16: #{vanilla_mlp.1} parent=11 // pred_fallthru
          _
        // Predicated region
        $region17: #{vanilla_mlp.1} parent=11 // pred_check
          %p146 = pneg %p81
        $region18: #{vanilla_mlp.1} parent=11 // pred_check_branch
          %148 = sbr.rel (%p146) target = $region20
        $region19: #{vanilla_mlp.1} parent=11 // pred_region
          _
        $region20: #{vanilla_mlp.1} parent=11 // pred_fallthru
          _
        // Predicated region
        $region21: #{vanilla_mlp.1} parent=11 // pred_check
          %p149 = pneg %p102
        $region22: #{vanilla_mlp.1} parent=11 // pred_check_branch
          %151 = sbr.rel (%p149) target = $region24
        $region23: #{vanilla_mlp.1} parent=11 // pred_region
          _
        $region24: #{vanilla_mlp.1} parent=11 // pred_fallthru
          _
      $region12: #{vanilla_mlp.1} parent=5 // pred_fallthru
        _
      %p152 = scmp.lt.s32.totalorder %s13, 8
      // Predicated region
      $region25: #{vanilla_mlp.1} parent=5 // pred_check
        %p153 = pneg %p152
      $region26: #{vanilla_mlp.1} parent=5 // pred_check_branch
        %155 = sbr.rel (%p153) target = $region28
      $region27: #{vanilla_mlp.1} parent=5 // pred_region
        // Predicated region
        $region29: #{vanilla_mlp.1} parent=27 // pred_check
          %p156 = pneg %p33
        $region30: #{vanilla_mlp.1} parent=27 // pred_check_branch
          %158 = sbr.rel (%p156) target = $region32
        $region31: #{vanilla_mlp.1} parent=27 // pred_region
          %s159 = smul.u32 64, %s13
          %s160 = ssub.s32 500, %s159
          %p161 = scmp.lt.s32.totalorder %s160, 64
          %s162 = scalar_select %p161, %s160, 64
          %s163 = smul.u32 8, %s162
          %p164 = scmp.lt.s32.totalorder %s159, 499
          %s165 = scalar_select %p164, %s159, 499
          %s166 = smul.addr %s165, 8
          %s167 = scalar_lea.vmem %s0, %s166
          %s168 = smul.u32 64, %s13
          %s169 = ssub.s32 500, %s168
          %p170 = scmp.lt.s32.totalorder %s169, 64
          %s171 = scalar_select %p170, %s169, 64
          %s172 = smul.u32 8, %s171
        $region32: #{vanilla_mlp.1} parent=27 // pred_fallthru
          _
      $region28: #{vanilla_mlp.1} parent=5 // pred_fallthru
        _
      %p173 = scmp.le.s32.totalorder 1, %s13
      %p174 = scmp.lt.s32.totalorder %s13, 9
      %p175 = pnand %p173, %p174
      %p176 = pneg %p175
      // Predicated region
      $region33: #{vanilla_mlp.1} parent=5 // pred_check
        _
      $region34: #{vanilla_mlp.1} parent=5 // pred_check_branch
        %178 = sbr.rel (%p175) target = $region36
      $region35: #{vanilla_mlp.1} parent=5 // pred_region
        %s179 = ssub.s32 %s13, 1
        %s180 = smul.u32 64, %s18
        %s181 = ssub.s32 500, %s180
        %p182 = scmp.lt.s32.totalorder %s181, 64
        %s183 = scalar_select %p182, %s181, 64
        %s184 = smul.u32 8, %s183
        %p185 = scmp.lt.s32.totalorder %s180, 499
        %s186 = scalar_select %p185, %s180, 499
        %s187 = smul.addr %s186, 8
        %s188 = scalar_lea.vmem %s0, %s187
        %p189 = pneg %p39
        %p190 = pneg %p36
        %p191 = pneg %p60
        %p192 = pneg %p57
        %p193 = pneg %p81
        %p194 = pneg %p78
        %p195 = pneg %p102
        %p196 = pneg %p99
        %p197 = pneg %p128
        %p198 = pneg %p125
        %s199 = sand.u32 %s115, 1
        %s200 = scalar_lea.sflag [#allocation3], %s199
        %s201 = sand.u32 %s115, 1
        %s202 = smul.addr %s201, 16
        %s203 = scalar_lea.vmem [#allocation2], %s202
        %s204 = smul.u32 64, %s18
        %s205 = ssub.s32 500, %s204
        %p206 = scmp.lt.s32.totalorder %s205, 64
        %s207 = scalar_select %p206, %s205, 64
        %s208 = smul.u32 8, %s207
        %p209 = scmp.lt.s32.totalorder %s204, 499
        %s210 = scalar_select %p209, %s204, 499
        %s211 = smul.addr %s210, 8
        %s212 = scalar_lea.vmem %s0, %s211
        %s213 = smul.u32 64, %s18
        %s214 = ssub.s32 500, %s213
        %p215 = scmp.lt.s32.totalorder %s214, 64
        %s216 = scalar_select %p215, %s214, 64
        %s217 = smul.u32 8, %s216
        %s218 = smul.u32 4, %s18
        %v220 = vld [vmem:[%s212] sm:$0xff]
        %v221 = vld [vmem:[%s212 + $0x8] sm:$0xff]
        %v222 = vld [vmem:[%s212 + $0x10] sm:$0xff]
        %v223 = vld [vmem:[%s212 + $0x18] sm:$0xff]
        %v224 = vld [vmem:[%s212 + $0x20] sm:$0xff]
        %v225 = vld [vmem:[%s212 + $0x28] sm:$0xff]
        %v226 = vld [vmem:[%s212 + $0x30] sm:$0xff]
        %v227 = vld [vmem:[%s212 + $0x38] sm:$0xff]
        %v228 = vld [vmem:[%s212 + $0x40] sm:$0xff]
        %v229 = vld [vmem:[%s212 + $0x48] sm:$0xff]
        %v230 = vld [vmem:[%s212 + $0x50] sm:$0xff]
        %v231 = vld [vmem:[%s212 + $0x58] sm:$0xff]
        %v232 = vld [vmem:[%s212 + $0x60] sm:$0xff]
        %v233 = vld [vmem:[%s212 + $0x68] sm:$0xff]
        %v234 = vld [vmem:[%s212 + $0x70] sm:$0xff]
        %v235 = vld [vmem:[%s212 + $0x78] sm:$0xff]
        %v236 = vld [vmem:[%s212 + $0x80] sm:$0xff]
        %v237 = vld [vmem:[%s212 + $0x88] sm:$0xff]
        %v238 = vld [vmem:[%s212 + $0x90] sm:$0xff]
        %v239 = vld [vmem:[%s212 + $0x98] sm:$0xff]
        %v240 = vld [vmem:[%s212 + $0xa0] sm:$0xff]
        %v241 = vld [vmem:[%s212 + $0xa8] sm:$0xff]
        %v242 = vld [vmem:[%s212 + $0xb0] sm:$0xff]
        %v243 = vld [vmem:[%s212 + $0xb8] sm:$0xff]
        %v244 = vld [vmem:[%s212 + $0xc0] sm:$0xff]
        %v245 = vld [vmem:[%s212 + $0xc8] sm:$0xff]
        %v246 = vld [vmem:[%s212 + $0xd0] sm:$0xff]
        %v247 = vld [vmem:[%s212 + $0xd8] sm:$0xff]
        %v248 = vld [vmem:[%s212 + $0xe0] sm:$0xff]
        %v249 = vld [vmem:[%s212 + $0xe8] sm:$0xff]
        %v250 = vld [vmem:[%s212 + $0xf0] sm:$0xff]
        %v251 = vld [vmem:[%s212 + $0xf8] sm:$0xff]
        %v252 = vld [vmem:[%s212 + $0x100] sm:$0xff]
        %v253 = vld [vmem:[%s212 + $0x108] sm:$0xff]
        %v254 = vld [vmem:[%s212 + $0x110] sm:$0xff]
        %v255 = vld [vmem:[%s212 + $0x118] sm:$0xff]
        %v256 = vld [vmem:[%s212 + $0x120] sm:$0xff]
        %v257 = vld [vmem:[%s212 + $0x128] sm:$0xff]
        %v258 = vld [vmem:[%s212 + $0x130] sm:$0xff]
        %v259 = vld [vmem:[%s212 + $0x138] sm:$0xff]
        %v260 = vld [vmem:[%s212 + $0x140] sm:$0xff]
        %v261 = vld [vmem:[%s212 + $0x148] sm:$0xff]
        %v262 = vld [vmem:[%s212 + $0x150] sm:$0xff]
        %v263 = vld [vmem:[%s212 + $0x158] sm:$0xff]
        %v264 = vld [vmem:[%s212 + $0x160] sm:$0xff]
        %v265 = vld [vmem:[%s212 + $0x168] sm:$0xff]
        %v266 = vld [vmem:[%s212 + $0x170] sm:$0xff]
        %v267 = vld [vmem:[%s212 + $0x178] sm:$0xff]
        %v268 = vld [vmem:[%s212 + $0x180] sm:$0xff]
        %v269 = vld [vmem:[%s212 + $0x188] sm:$0xff]
        %v270 = vld [vmem:[%s212 + $0x190] sm:$0xff]
        %v271 = vld [vmem:[%s212 + $0x198] sm:$0xff]
        %v272 = vld [vmem:[%s212 + $0x1a0] sm:$0xff]
        %v273 = vld [vmem:[%s212 + $0x1a8] sm:$0xff]
        %v274 = vld [vmem:[%s212 + $0x1b0] sm:$0xff]
        %v275 = vld [vmem:[%s212 + $0x1b8] sm:$0xff]
        %v276 = vld [vmem:[%s212 + $0x1c0] sm:$0xff]
        %v277 = vld [vmem:[%s212 + $0x1c8] sm:$0xff]
        %v278 = vld [vmem:[%s212 + $0x1d0] sm:$0xff]
        %v279 = vld [vmem:[%s212 + $0x1d8] sm:$0xff]
        %v280 = vld [vmem:[%s212 + $0x1e0] sm:$0xff]
        %v281 = vld [vmem:[%s212 + $0x1e8] sm:$0xff]
        %v282 = vld [vmem:[%s212 + $0x1f0] sm:$0xff]
        %v283 = vld [vmem:[%s212 + $0x1f8] sm:$0xff]
        %v284 = vld [vmem:[%s1] sm:$0xff]
        %v285 = vld [vmem:[%s1 + $0x8] sm:$0xff]
        %v286 = vld [vmem:[%s1 + $0x10] sm:$0xff]
        %v287 = vld [vmem:[%s1 + $0x18] sm:$0xff]
        %v288 = vld [vmem:[%s1 + $0x20] sm:$0xff]
        %v289 = vld [vmem:[%s1 + $0x28] sm:$0xff]
        %v290 = vld [vmem:[%s1 + $0x30] sm:$0xff]
        %v291 = vld [vmem:[%s1 + $0x38] sm:$0xff]
        %vm292 = vcmask 64512
        %v294 = vsel %vm292, %v284, 0
        %v297 = vsel %vm292, %v285, 0
        %v300 = vsel %vm292, %v286, 0
        %v303 = vsel %vm292, %v287, 0
        %v306 = vsel %vm292, %v288, 0
        %v309 = vsel %vm292, %v289, 0
        %v312 = vsel %vm292, %v290, 0
        %v315 = vsel %vm292, %v291, 0
        %v318 = vsel %vm292, %v220, 0
        %v321 = vsel %vm292, %v221, 0
        %v324 = vsel %vm292, %v222, 0
        %v327 = vsel %vm292, %v223, 0
        %v330 = vsel %vm292, %v224, 0
        %v333 = vsel %vm292, %v225, 0
        %v336 = vsel %vm292, %v226, 0
        %v339 = vsel %vm292, %v227, 0
        %v342 = vsel %vm292, %v228, 0
        %v345 = vsel %vm292, %v229, 0
        %v348 = vsel %vm292, %v230, 0
        %v351 = vsel %vm292, %v231, 0
        %v354 = vsel %vm292, %v232, 0
        %v357 = vsel %vm292, %v233, 0
        %v360 = vsel %vm292, %v234, 0
        %v363 = vsel %vm292, %v235, 0
        %v366 = vsel %vm292, %v236, 0
        %v369 = vsel %vm292, %v237, 0
        %v372 = vsel %vm292, %v238, 0
        %v375 = vsel %vm292, %v239, 0
        %v378 = vsel %vm292, %v240, 0
        %v381 = vsel %vm292, %v241, 0
        %v384 = vsel %vm292, %v242, 0
        %v387 = vsel %vm292, %v243, 0
        %v390 = vsel %vm292, %v244, 0
        %v393 = vsel %vm292, %v245, 0
        %v396 = vsel %vm292, %v246, 0
        %v399 = vsel %vm292, %v247, 0
        %v402 = vsel %vm292, %v248, 0
        %v405 = vsel %vm292, %v249, 0
        %v408 = vsel %vm292, %v250, 0
        %v411 = vsel %vm292, %v251, 0
        %v414 = vsel %vm292, %v252, 0
        %v417 = vsel %vm292, %v253, 0
        %v420 = vsel %vm292, %v254, 0
        %v423 = vsel %vm292, %v255, 0
        %v426 = vsel %vm292, %v256, 0
        %v429 = vsel %vm292, %v257, 0
        %v432 = vsel %vm292, %v258, 0
        %v435 = vsel %vm292, %v259, 0
        %v438 = vsel %vm292, %v260, 0
        %v441 = vsel %vm292, %v261, 0
        %v444 = vsel %vm292, %v262, 0
        %v447 = vsel %vm292, %v263, 0
        %v450 = vsel %vm292, %v264, 0
        %v453 = vsel %vm292, %v265, 0
        %v456 = vsel %vm292, %v266, 0
        %v459 = vsel %vm292, %v267, 0
        %v462 = vsel %vm292, %v268, 0
        %v465 = vsel %vm292, %v269, 0
        %v468 = vsel %vm292, %v270, 0
        %v471 = vsel %vm292, %v271, 0
        %v474 = vsel %vm292, %v272, 0
        %v477 = vsel %vm292, %v273, 0
        %v480 = vsel %vm292, %v274, 0
        %v483 = vsel %vm292, %v275, 0
        %v486 = vsel %vm292, %v276, 0
        %v489 = vsel %vm292, %v277, 0
        %v492 = vsel %vm292, %v278, 0
        %v495 = vsel %vm292, %v279, 0
        %v498 = vsel %vm292, %v280, 0
        %v501 = vsel %vm292, %v281, 0
        %v504 = vsel %vm292, %v282, 0
        %v507 = vsel %vm292, %v283, 0
        %509 = vmatpush.xpose.msra.mxu0 %v363
        %510 = vmatpush.xpose.msra.mxu0 %v360
        %511 = vmatpush.xpose.msra.mxu0 %v357
        %512 = vmatpush.xpose.msra.mxu0 %v354
        %513 = vmatpush.xpose.msra.mxu0 %v351
        %514 = vmatpush.xpose.msra.mxu0 %v348
        %515 = vmatpush.xpose.msra.mxu0 %v345
        %516 = vmatpush.xpose.msra.mxu0 %v342
        %517 = vmatpush.xpose.msra.mxu0 %v339
        %518 = vmatpush.xpose.msra.mxu0 %v336
        %519 = vmatpush.xpose.msra.mxu0 %v333
        %520 = vmatpush.xpose.msra.mxu0 %v330
        %521 = vmatpush.xpose.msra.mxu0 %v327
        %522 = vmatpush.xpose.msra.mxu0 %v324
        %523 = vmatpush.xpose.msra.mxu0 %v321
        %524 = vmatpush.xpose.msra.mxu0 %v318
        %525 = vmatmul.f32.gmra.mxu0 %v294
        %v526 = vpop.f32.mrf.mxu0
        %v527 = vadd.f32 0.0, %v526
        %528 = vmatmul.f32.gmra.mxu0 %v297
        %v529 = vpop.f32.mrf.mxu0
        %v530 = vadd.f32 0.0, %v529
        %531 = vmatmul.f32.gmra.mxu0 %v300
        %v532 = vpop.f32.mrf.mxu0
        %v533 = vadd.f32 0.0, %v532
        %534 = vmatmul.f32.gmra.mxu0 %v303
        %v535 = vpop.f32.mrf.mxu0
        %v536 = vadd.f32 0.0, %v535
        %537 = vmatmul.f32.gmra.mxu0 %v306
        %v538 = vpop.f32.mrf.mxu0
        %v539 = vadd.f32 0.0, %v538
        %540 = vmatmul.f32.gmra.mxu0 %v309
        %v541 = vpop.f32.mrf.mxu0
        %v542 = vadd.f32 0.0, %v541
        %543 = vmatmul.f32.gmra.mxu0 %v312
        %v544 = vpop.f32.mrf.mxu0
        %v545 = vadd.f32 0.0, %v544
        %546 = vmatmul.f32.gmra.mxu0 %v315
        %v547 = vpop.f32.mrf.mxu0
        %v548 = vadd.f32 0.0, %v547
        %549 = vdwg.mxu0
        %550 = vmatpush.xpose.msra.mxu0 %v411
        %551 = vmatpush.xpose.msra.mxu0 %v408
        %552 = vmatpush.xpose.msra.mxu0 %v405
        %553 = vmatpush.xpose.msra.mxu0 %v402
        %554 = vmatpush.xpose.msra.mxu0 %v399
        %555 = vmatpush.xpose.msra.mxu0 %v396
        %556 = vmatpush.xpose.msra.mxu0 %v393
        %557 = vmatpush.xpose.msra.mxu0 %v390
        %558 = vmatpush.xpose.msra.mxu0 %v387
        %559 = vmatpush.xpose.msra.mxu0 %v384
        %560 = vmatpush.xpose.msra.mxu0 %v381
        %561 = vmatpush.xpose.msra.mxu0 %v378
        %562 = vmatpush.xpose.msra.mxu0 %v375
        %563 = vmatpush.xpose.msra.mxu0 %v372
        %564 = vmatpush.xpose.msra.mxu0 %v369
        %565 = vmatpush.xpose.msra.mxu0 %v366
        %566 = vmatmul.f32.gmra.mxu0 %v294
        %v567 = vpop.f32.mrf.mxu0
        %v568 = vadd.f32 0.0, %v567
        %569 = vmatmul.f32.gmra.mxu0 %v297
        %v570 = vpop.f32.mrf.mxu0
        %v571 = vadd.f32 0.0, %v570
        %572 = vmatmul.f32.gmra.mxu0 %v300
        %v573 = vpop.f32.mrf.mxu0
        %v574 = vadd.f32 0.0, %v573
        %575 = vmatmul.f32.gmra.mxu0 %v303
        %v576 = vpop.f32.mrf.mxu0
        %v577 = vadd.f32 0.0, %v576
        %578 = vmatmul.f32.gmra.mxu0 %v306
        %v579 = vpop.f32.mrf.mxu0
        %v580 = vadd.f32 0.0, %v579
        %581 = vmatmul.f32.gmra.mxu0 %v309
        %v582 = vpop.f32.mrf.mxu0
        %v583 = vadd.f32 0.0, %v582
        %584 = vmatmul.f32.gmra.mxu0 %v312
        %v585 = vpop.f32.mrf.mxu0
        %v586 = vadd.f32 0.0, %v585
        %587 = vmatmul.f32.gmra.mxu0 %v315
        %v588 = vpop.f32.mrf.mxu0
        %v589 = vadd.f32 0.0, %v588
        %590 = vdwg.mxu0
        %591 = vmatpush.xpose.msra.mxu0 %v459
        %592 = vmatpush.xpose.msra.mxu0 %v456
        %593 = vmatpush.xpose.msra.mxu0 %v453
        %594 = vmatpush.xpose.msra.mxu0 %v450
        %595 = vmatpush.xpose.msra.mxu0 %v447
        %596 = vmatpush.xpose.msra.mxu0 %v444
        %597 = vmatpush.xpose.msra.mxu0 %v441
        %598 = vmatpush.xpose.msra.mxu0 %v438
        %599 = vmatpush.xpose.msra.mxu0 %v435
        %600 = vmatpush.xpose.msra.mxu0 %v432
        %601 = vmatpush.xpose.msra.mxu0 %v429
        %602 = vmatpush.xpose.msra.mxu0 %v426
        %603 = vmatpush.xpose.msra.mxu0 %v423
        %604 = vmatpush.xpose.msra.mxu0 %v420
        %605 = vmatpush.xpose.msra.mxu0 %v417
        %606 = vmatpush.xpose.msra.mxu0 %v414
        %607 = vmatmul.f32.gmra.mxu0 %v294
        %v608 = vpop.f32.mrf.mxu0
        %v609 = vadd.f32 0.0, %v608
        %610 = vmatmul.f32.gmra.mxu0 %v297
        %v611 = vpop.f32.mrf.mxu0
        %v612 = vadd.f32 0.0, %v611
        %613 = vmatmul.f32.gmra.mxu0 %v300
        %v614 = vpop.f32.mrf.mxu0
        %v615 = vadd.f32 0.0, %v614
        %616 = vmatmul.f32.gmra.mxu0 %v303
        %v617 = vpop.f32.mrf.mxu0
        %v618 = vadd.f32 0.0, %v617
        %619 = vmatmul.f32.gmra.mxu0 %v306
        %v620 = vpop.f32.mrf.mxu0
        %v621 = vadd.f32 0.0, %v620
        %622 = vmatmul.f32.gmra.mxu0 %v309
        %v623 = vpop.f32.mrf.mxu0
        %v624 = vadd.f32 0.0, %v623
        %625 = vmatmul.f32.gmra.mxu0 %v312
        %v626 = vpop.f32.mrf.mxu0
        %v627 = vadd.f32 0.0, %v626
        %628 = vmatmul.f32.gmra.mxu0 %v315
        %v629 = vpop.f32.mrf.mxu0
        %v630 = vadd.f32 0.0, %v629
        %631 = vdwg.mxu0
        %632 = vmatpush.xpose.msra.mxu0 %v507
        %633 = vmatpush.xpose.msra.mxu0 %v504
        %634 = vmatpush.xpose.msra.mxu0 %v501
        %635 = vmatpush.xpose.msra.mxu0 %v498
        %636 = vmatpush.xpose.msra.mxu0 %v495
        %637 = vmatpush.xpose.msra.mxu0 %v492
        %638 = vmatpush.xpose.msra.mxu0 %v489
        %639 = vmatpush.xpose.msra.mxu0 %v486
        %640 = vmatpush.xpose.msra.mxu0 %v483
        %641 = vmatpush.xpose.msra.mxu0 %v480
        %642 = vmatpush.xpose.msra.mxu0 %v477
        %643 = vmatpush.xpose.msra.mxu0 %v474
        %644 = vmatpush.xpose.msra.mxu0 %v471
        %645 = vmatpush.xpose.msra.mxu0 %v468
        %646 = vmatpush.xpose.msra.mxu0 %v465
        %647 = vmatpush.xpose.msra.mxu0 %v462
        %648 = vmatmul.f32.gmra.mxu0 %v294
        %v649 = vpop.f32.mrf.mxu0
        %v650 = vadd.f32 0.0, %v649
        %651 = vmatmul.f32.gmra.mxu0 %v297
        %v652 = vpop.f32.mrf.mxu0
        %v653 = vadd.f32 0.0, %v652
        %654 = vmatmul.f32.gmra.mxu0 %v300
        %v655 = vpop.f32.mrf.mxu0
        %v656 = vadd.f32 0.0, %v655
        %657 = vmatmul.f32.gmra.mxu0 %v303
        %v658 = vpop.f32.mrf.mxu0
        %v659 = vadd.f32 0.0, %v658
        %660 = vmatmul.f32.gmra.mxu0 %v306
        %v661 = vpop.f32.mrf.mxu0
        %v662 = vadd.f32 0.0, %v661
        %663 = vmatmul.f32.gmra.mxu0 %v309
        %v664 = vpop.f32.mrf.mxu0
        %v665 = vadd.f32 0.0, %v664
        %666 = vmatmul.f32.gmra.mxu0 %v312
        %v667 = vpop.f32.mrf.mxu0
        %v668 = vadd.f32 0.0, %v667
        %669 = vmatmul.f32.gmra.mxu0 %v315
        %v670 = vpop.f32.mrf.mxu0
        %v671 = vadd.f32 0.0, %v670
        %672 = vdwg.mxu0
        %v673 = vmax.f32 %v527, 0.0
        %v674 = vmax.f32 %v568, 0.0
        %v675 = vmax.f32 %v609, 0.0
        %v676 = vmax.f32 %v650, 0.0
        %v677 = vmax.f32 %v530, 0.0
        %v678 = vmax.f32 %v571, 0.0
        %v679 = vmax.f32 %v612, 0.0
        %v680 = vmax.f32 %v653, 0.0
        %v681 = vmax.f32 %v533, 0.0
        %v682 = vmax.f32 %v574, 0.0
        %v683 = vmax.f32 %v615, 0.0
        %v684 = vmax.f32 %v656, 0.0
        %v685 = vmax.f32 %v536, 0.0
        %v686 = vmax.f32 %v577, 0.0
        %v687 = vmax.f32 %v618, 0.0
        %v688 = vmax.f32 %v659, 0.0
        %v689 = vmax.f32 %v539, 0.0
        %v690 = vmax.f32 %v580, 0.0
        %v691 = vmax.f32 %v621, 0.0
        %v692 = vmax.f32 %v662, 0.0
        %v693 = vmax.f32 %v542, 0.0
        %v694 = vmax.f32 %v583, 0.0
        %v695 = vmax.f32 %v624, 0.0
        %v696 = vmax.f32 %v665, 0.0
        %v697 = vmax.f32 %v545, 0.0
        %v698 = vmax.f32 %v586, 0.0
        %v699 = vmax.f32 %v627, 0.0
        %v700 = vmax.f32 %v668, 0.0
        %v701 = vmax.f32 %v548, 0.0
        %v702 = vmax.f32 %v589, 0.0
        %v703 = vmax.f32 %v630, 0.0
        %v704 = vmax.f32 %v671, 0.0
        %v705 = vpack.c.bf16 %v677, %v673
        %v706 = vpack.c.bf16 %v678, %v674
        %v707 = vpack.c.bf16 %v679, %v675
        %v708 = vpack.c.bf16 %v680, %v676
        %v709 = vpack.c.bf16 %v685, %v681
        %v710 = vpack.c.bf16 %v686, %v682
        %v711 = vpack.c.bf16 %v687, %v683
        %v712 = vpack.c.bf16 %v688, %v684
        %v713 = vpack.c.bf16 %v693, %v689
        %v714 = vpack.c.bf16 %v694, %v690
        %v715 = vpack.c.bf16 %v695, %v691
        %v716 = vpack.c.bf16 %v696, %v692
        %v717 = vpack.c.bf16 %v701, %v697
        %v718 = vpack.c.bf16 %v702, %v698
        %v719 = vpack.c.bf16 %v703, %v699
        %v720 = vpack.c.bf16 %v704, %v700
        %v721 = vld [vmem:[%s2] sm:$0xf]
        %v722 = vld [vmem:[%s2 + $0x4] sm:$0xf]
        %v723 = vld [vmem:[%s2 + $0x8] sm:$0xf]
        %v724 = vld [vmem:[%s2 + $0xc] sm:$0xf]
        %v725 = vld [vmem:[%s2 + $0x10] sm:$0xf]
        %v726 = vld [vmem:[%s2 + $0x14] sm:$0xf]
        %v727 = vld [vmem:[%s2 + $0x18] sm:$0xf]
        %v728 = vld [vmem:[%s2 + $0x1c] sm:$0xf]
        %v737 = vunpack.c.l.b16 %v721
        %v738 = vunpack.c.l.b16 %v722
        %v739 = vunpack.c.l.b16 %v723
        %v740 = vunpack.c.l.b16 %v724
        %v741 = vunpack.c.l.b16 %v725
        %v742 = vunpack.c.l.b16 %v726
        %v743 = vunpack.c.l.b16 %v727
        %v744 = vunpack.c.l.b16 %v728
        %v745 = vpack.c.b16 %v738, %v737
        %v746 = vpack.c.b16 %v740, %v739
        %v747 = vpack.c.b16 %v742, %v741
        %v748 = vpack.c.b16 %v744, %v743
        %vm749 = vcmask 523264
        %v751 = vsel %vm749, %v745, 0
        %v754 = vsel %vm749, %v746, 0
        %v757 = vsel %vm749, %v747, 0
        %v760 = vsel %vm749, %v748, 0
        %762 = vmatpush.bf16.msra.mxu0 0
        %763 = vmatpush.bf16.msra.mxu0 0
        %764 = vmatpush.bf16.msra.mxu0 0
        %765 = vmatpush.bf16.msra.mxu0 0
        %766 = vmatpush.bf16.msra.mxu0 %v717
        %767 = vmatpush.bf16.msra.mxu0 %v713
        %768 = vmatpush.bf16.msra.mxu0 %v709
        %769 = vmatpush.bf16.msra.mxu0 %v705
        %770 = vmatmul.bf16.gmra.mxu0 %v751
        %v771 = vpop.f32.mrf.mxu0
        %v772 = vadd.f32 0.0, %v771
        %v773 = vpop.f32.mrf.mxu0
        %v774 = vadd.f32 0.0, %v773
        %775 = vmatmul.bf16.gmra.mxu0 %v754
        %v776 = vpop.f32.mrf.mxu0
        %v777 = vadd.f32 0.0, %v776
        %v778 = vpop.f32.mrf.mxu0
        %v779 = vadd.f32 0.0, %v778
        %780 = vmatmul.bf16.gmra.mxu0 %v757
        %v781 = vpop.f32.mrf.mxu0
        %v782 = vadd.f32 0.0, %v781
        %v783 = vpop.f32.mrf.mxu0
        %v784 = vadd.f32 0.0, %v783
        %785 = vmatmul.bf16.gmra.mxu0 %v760
        %v786 = vpop.f32.mrf.mxu0
        %v787 = vadd.f32 0.0, %v786
        %v788 = vpop.f32.mrf.mxu0
        %v789 = vadd.f32 0.0, %v788
        %790 = vdwg.mxu0
        %791 = vmatpush.bf16.msra.mxu0 0
        %792 = vmatpush.bf16.msra.mxu0 0
        %793 = vmatpush.bf16.msra.mxu0 0
        %794 = vmatpush.bf16.msra.mxu0 0
        %795 = vmatpush.bf16.msra.mxu0 %v718
        %796 = vmatpush.bf16.msra.mxu0 %v714
        %797 = vmatpush.bf16.msra.mxu0 %v710
        %798 = vmatpush.bf16.msra.mxu0 %v706
        %799 = vmatmul.bf16.gmra.mxu0 %v751
        %v800 = vpop.f32.mrf.mxu0
        %v801 = vadd.f32 0.0, %v800
        %v802 = vpop.f32.mrf.mxu0
        %v803 = vadd.f32 0.0, %v802
        %804 = vmatmul.bf16.gmra.mxu0 %v754
        %v805 = vpop.f32.mrf.mxu0
        %v806 = vadd.f32 0.0, %v805
        %v807 = vpop.f32.mrf.mxu0
        %v808 = vadd.f32 0.0, %v807
        %809 = vmatmul.bf16.gmra.mxu0 %v757
        %v810 = vpop.f32.mrf.mxu0
        %v811 = vadd.f32 0.0, %v810
        %v812 = vpop.f32.mrf.mxu0
        %v813 = vadd.f32 0.0, %v812
        %814 = vmatmul.bf16.gmra.mxu0 %v760
        %v815 = vpop.f32.mrf.mxu0
        %v816 = vadd.f32 0.0, %v815
        %v817 = vpop.f32.mrf.mxu0
        %v818 = vadd.f32 0.0, %v817
        %819 = vdwg.mxu0
        %820 = vmatpush.bf16.msra.mxu0 0
        %821 = vmatpush.bf16.msra.mxu0 0
        %822 = vmatpush.bf16.msra.mxu0 0
        %823 = vmatpush.bf16.msra.mxu0 0
        %824 = vmatpush.bf16.msra.mxu0 %v719
        %825 = vmatpush.bf16.msra.mxu0 %v715
        %826 = vmatpush.bf16.msra.mxu0 %v711
        %827 = vmatpush.bf16.msra.mxu0 %v707
        %828 = vmatmul.bf16.gmra.mxu0 %v751
        %v829 = vpop.f32.mrf.mxu0
        %v830 = vadd.f32 0.0, %v829
        %v831 = vpop.f32.mrf.mxu0
        %v832 = vadd.f32 0.0, %v831
        %833 = vmatmul.bf16.gmra.mxu0 %v754
        %v834 = vpop.f32.mrf.mxu0
        %v835 = vadd.f32 0.0, %v834
        %v836 = vpop.f32.mrf.mxu0
        %v837 = vadd.f32 0.0, %v836
        %838 = vmatmul.bf16.gmra.mxu0 %v757
        %v839 = vpop.f32.mrf.mxu0
        %v840 = vadd.f32 0.0, %v839
        %v841 = vpop.f32.mrf.mxu0
        %v842 = vadd.f32 0.0, %v841
        %843 = vmatmul.bf16.gmra.mxu0 %v760
        %v844 = vpop.f32.mrf.mxu0
        %v845 = vadd.f32 0.0, %v844
        %v846 = vpop.f32.mrf.mxu0
        %v847 = vadd.f32 0.0, %v846
        %848 = vdwg.mxu0
        %849 = vmatpush.bf16.msra.mxu0 0
        %850 = vmatpush.bf16.msra.mxu0 0
        %851 = vmatpush.bf16.msra.mxu0 0
        %852 = vmatpush.bf16.msra.mxu0 0
        %853 = vmatpush.bf16.msra.mxu0 %v720
        %854 = vmatpush.bf16.msra.mxu0 %v716
        %855 = vmatpush.bf16.msra.mxu0 %v712
        %856 = vmatpush.bf16.msra.mxu0 %v708
        %857 = vmatmul.bf16.gmra.mxu0 %v751
        %v858 = vpop.f32.mrf.mxu0
        %v859 = vadd.f32 0.0, %v858
        %v860 = vpop.f32.mrf.mxu0
        %v861 = vadd.f32 0.0, %v860
        %862 = vmatmul.bf16.gmra.mxu0 %v754
        %v863 = vpop.f32.mrf.mxu0
        %v864 = vadd.f32 0.0, %v863
        %v865 = vpop.f32.mrf.mxu0
        %v866 = vadd.f32 0.0, %v865
        %867 = vmatmul.bf16.gmra.mxu0 %v757
        %v868 = vpop.f32.mrf.mxu0
        %v869 = vadd.f32 0.0, %v868
        %v870 = vpop.f32.mrf.mxu0
        %v871 = vadd.f32 0.0, %v870
        %872 = vmatmul.bf16.gmra.mxu0 %v760
        %v873 = vpop.f32.mrf.mxu0
        %v874 = vadd.f32 0.0, %v873
        %v875 = vpop.f32.mrf.mxu0
        %v876 = vadd.f32 0.0, %v875
        %877 = vdwg.mxu0
        %v878 = vmax.f32 %v772, 0.0
        %v879 = vmax.f32 %v801, 0.0
        %v880 = vmax.f32 %v830, 0.0
        %v881 = vmax.f32 %v859, 0.0
        %v882 = vmax.f32 %v774, 0.0
        %v883 = vmax.f32 %v803, 0.0
        %v884 = vmax.f32 %v832, 0.0
        %v885 = vmax.f32 %v861, 0.0
        %v886 = vmax.f32 %v777, 0.0
        %v887 = vmax.f32 %v806, 0.0
        %v888 = vmax.f32 %v835, 0.0
        %v889 = vmax.f32 %v864, 0.0
        %v890 = vmax.f32 %v779, 0.0
        %v891 = vmax.f32 %v808, 0.0
        %v892 = vmax.f32 %v837, 0.0
        %v893 = vmax.f32 %v866, 0.0
        %v894 = vmax.f32 %v782, 0.0
        %v895 = vmax.f32 %v811, 0.0
        %v896 = vmax.f32 %v840, 0.0
        %v897 = vmax.f32 %v869, 0.0
        %v898 = vmax.f32 %v784, 0.0
        %v899 = vmax.f32 %v813, 0.0
        %v900 = vmax.f32 %v842, 0.0
        %v901 = vmax.f32 %v871, 0.0
        %v902 = vmax.f32 %v787, 0.0
        %v903 = vmax.f32 %v816, 0.0
        %v904 = vmax.f32 %v845, 0.0
        %v905 = vmax.f32 %v874, 0.0
        %v906 = vmax.f32 %v789, 0.0
        %v907 = vmax.f32 %v818, 0.0
        %v908 = vmax.f32 %v847, 0.0
        %v909 = vmax.f32 %v876, 0.0
        %v910 = vpack.c.bf16 %v882, %v878
        %v911 = vpack.c.bf16 %v883, %v879
        %v912 = vpack.c.bf16 %v884, %v880
        %v913 = vpack.c.bf16 %v885, %v881
        %v914 = vpack.c.bf16 %v890, %v886
        %v915 = vpack.c.bf16 %v891, %v887
        %v916 = vpack.c.bf16 %v892, %v888
        %v917 = vpack.c.bf16 %v893, %v889
        %v918 = vpack.c.bf16 %v898, %v894
        %v919 = vpack.c.bf16 %v899, %v895
        %v920 = vpack.c.bf16 %v900, %v896
        %v921 = vpack.c.bf16 %v901, %v897
        %v922 = vpack.c.bf16 %v906, %v902
        %v923 = vpack.c.bf16 %v907, %v903
        %v924 = vpack.c.bf16 %v908, %v904
        %v925 = vpack.c.bf16 %v909, %v905
        %v926 = vld [vmem:[%s3] sm:$0x3]
        %v928 = vsel %vm749, %v926, 0
        %930 = vmatpush.bf16.msra.mxu0 0
        %931 = vmatpush.bf16.msra.mxu0 0
        %932 = vmatpush.bf16.msra.mxu0 0
        %933 = vmatpush.bf16.msra.mxu0 0
        %934 = vmatpush.bf16.msra.mxu0 %v922
        %935 = vmatpush.bf16.msra.mxu0 %v918
        %936 = vmatpush.bf16.msra.mxu0 %v914
        %937 = vmatpush.bf16.msra.mxu0 %v910
        %938 = vmatmul.bf16.gmra.mxu0 %v928
        %v939 = vpop.f32.mrf.mxu0
        %v940 = vadd.f32 0.0, %v939
        %v941 = vpop.f32.mrf.mxu0
        %942 = vdwg.mxu0
        %943 = vmatpush.bf16.msra.mxu0 0
        %944 = vmatpush.bf16.msra.mxu0 0
        %945 = vmatpush.bf16.msra.mxu0 0
        %946 = vmatpush.bf16.msra.mxu0 0
        %947 = vmatpush.bf16.msra.mxu0 %v923
        %948 = vmatpush.bf16.msra.mxu0 %v919
        %949 = vmatpush.bf16.msra.mxu0 %v915
        %950 = vmatpush.bf16.msra.mxu0 %v911
        %951 = vmatmul.bf16.gmra.mxu0 %v928
        %v952 = vpop.f32.mrf.mxu0
        %v953 = vadd.f32 0.0, %v952
        %v954 = vpop.f32.mrf.mxu0
        %955 = vdwg.mxu0
        %956 = vmatpush.bf16.msra.mxu0 0
        %957 = vmatpush.bf16.msra.mxu0 0
        %958 = vmatpush.bf16.msra.mxu0 0
        %959 = vmatpush.bf16.msra.mxu0 0
        %960 = vmatpush.bf16.msra.mxu0 %v924
        %961 = vmatpush.bf16.msra.mxu0 %v920
        %962 = vmatpush.bf16.msra.mxu0 %v916
        %963 = vmatpush.bf16.msra.mxu0 %v912
        %964 = vmatmul.bf16.gmra.mxu0 %v928
        %v965 = vpop.f32.mrf.mxu0
        %v966 = vadd.f32 0.0, %v965
        %v967 = vpop.f32.mrf.mxu0
        %968 = vdwg.mxu0
        %969 = vmatpush.bf16.msra.mxu0 0
        %970 = vmatpush.bf16.msra.mxu0 0
        %971 = vmatpush.bf16.msra.mxu0 0
        %972 = vmatpush.bf16.msra.mxu0 0
        %973 = vmatpush.bf16.msra.mxu0 %v925
        %974 = vmatpush.bf16.msra.mxu0 %v921
        %975 = vmatpush.bf16.msra.mxu0 %v917
        %976 = vmatpush.bf16.msra.mxu0 %v913
        %977 = vmatmul.bf16.gmra.mxu0 %v928
        %v978 = vpop.f32.mrf.mxu0
        %v979 = vadd.f32 0.0, %v978
        %v980 = vpop.f32.mrf.mxu0
        %981 = vdwg.mxu0
        %v986 = vrot.slane %v953, 4
        %v987 = vrot.slane %v979, 4
        %vm988 = vcmask 1043456
        %v989 = vsel %vm988, %v940, %v986
        %v990 = vsel %vm988, %v966, %v987
        %993 = vst [vmem:[%s203] sm:$0xff] %v989
        %994 = vst [vmem:[%s203 + $0x8] sm:$0xff] %v990
        %s995 = sand.u32 %s115, 1
        %s996 = scalar_lea.sflag [#allocation3], %s995
        %s997 = sand.u32 %s115, 1
        %s998 = smul.addr %s997, 16
        %s999 = scalar_lea.vmem [#allocation2], %s998
        // Predicated region
        $region37: #{vanilla_mlp.1} parent=35 // pred_check
          %p1000 = pneg %p125
        $region38: #{vanilla_mlp.1} parent=35 // pred_check_branch
          %1002 = sbr.rel (%p1000) target = $region40
        $region39: #{vanilla_mlp.1} parent=35 // pred_region
          %s1003 = smul.u32 4, %s18
          %1005 = vsyncadd %s996, 0
          %s1006 = smul.addr %s1003, 4
          %s1007 = scalar_lea.hbm %s4, %s1006
          %s1009 = sshll.u32 %s999, 4
          %s1010 = int_to_ptr.vmem [resolvable:$true] %s1009
          %s1011 = sshll.u32 %s1007, 4
          %s1012 = int_to_ptr.hbm [resolvable:$true] %s1011
          %1014 = dma.vmem_to_hbm [thread:$0]  %s1010, 256, %s1012, %s996
        $region40: #{vanilla_mlp.1} parent=35 // pred_fallthru
          _
      $region36: #{vanilla_mlp.1} parent=5 // pred_fallthru
        _
      %p1015 = scmp.le.s32.totalorder 2, %s13
      // Predicated region
      $region41: #{vanilla_mlp.1} parent=5 // pred_check
        %p1016 = pneg %p1015
      $region42: #{vanilla_mlp.1} parent=5 // pred_check_branch
        %1018 = sbr.rel (%p1016) target = $region44
      $region43: #{vanilla_mlp.1} parent=5 // pred_region
        %s1019 = ssub.s32 %s13, 2
        // Predicated region
        $region45: #{vanilla_mlp.1} parent=43 // pred_check
          %p1020 = pneg %p131
        $region46: #{vanilla_mlp.1} parent=43 // pred_check_branch
          %1022 = sbr.rel (%p1020) target = $region48
        $region47: #{vanilla_mlp.1} parent=43 // pred_region
          %s1023 = sand.u32 %s116, 1
          %s1024 = scalar_lea.sflag [#allocation3], %s1023
          %s1025 = sand.u32 %s116, 1
          %s1026 = smul.addr %s1025, 16
          %s1027 = scalar_lea.vmem [#allocation2], %s1026
          %1029 = dma.done %s1024, 256
        $region48: #{vanilla_mlp.1} parent=43 // pred_fallthru
          _
      $region44: #{vanilla_mlp.1} parent=5 // pred_fallthru
        _
    $region6: #{vanilla_mlp.1} parent=1 // loop_footer
      %s17 = sadd.s32 1, %s13
    $region7: #{vanilla_mlp.1} parent=1 // loop_footer_branch
      %12 = sbr.rel target = $region3
    $region8: #{vanilla_mlp.1} parent=1 // loop_exit
      _
    %1030 = vsyncpa [#allocation3], 1
    %s1031 = scalar_lea.sflag [#allocation3], 1
    %1032 = vsyncpa %s1031, 1

</llo_original>
